<compile_context>
chip_gen: v5e
topology: v5e:2x2
jax: 0.10.0
libtpu: 0.0.40
codegen_flags: <defaults>
</compile_context>

<pallas_src>
import jax
import jax.numpy as jnp
from jax.experimental import pallas as pl
from jax.experimental.pallas import tpu as pltpu


_SUBLANES = 16  # multiple of 8 (f32 sublanes) and 16 (bf16 sublane packing)


def _shadow_kernel(x_ref, w_ref, b_ref, o_ref):
    # x_ref: (TB, D) native-dtype VMEM, w_ref: (1, D) f32 VMEM,
    # b_ref: (1, 1) f32 SMEM, o_ref: (TB, 1) f32 VMEM.
    x = x_ref[...].astype(jnp.float32)                   # VPU upcast (no-op for f32)
    # VPU lane-dense multiply fused into an XLU row reduce; the VMEM budget in
    # the wrapper conservatively assumes the (TB, D) product may materialize.
    z = jnp.sum(x * w_ref[...], axis=-1, keepdims=True) + b_ref[0, 0]
    o_ref[...] = jax.nn.sigmoid(z).astype(o_ref.dtype)   # EUP transcendental


def _round_up(n, m):
    return ((n + m - 1) // m) * m


def shadow_model_forward(x_nchw, weight, bias, *, tb_max=2048):
    """sigmoid(flatten(x) @ weight.T + bias).

    x_nchw: (B, ...) activations, streamed in native dtype (f32 or bf16).
    weight: (1, D) torch nn.Linear weight; bias: (1,).
    Returns (B, 1) float32.
    """
    B = x_nchw.shape[0]
    x2d = x_nchw.reshape(B, -1)
    if x2d.dtype not in (jnp.float32, jnp.bfloat16):
        x2d = x2d.astype(jnp.float32)
    D = x2d.shape[1]
    x_bytes = jnp.dtype(x2d.dtype).itemsize

    w = weight.reshape(1, D).astype(jnp.float32)   # lane-major, VMEM-resident
    b = bias.reshape(1, 1).astype(jnp.float32)     # (1,1) scalar -> SMEM

    # Tiny batches are pure launch overhead; let plain XLA handle them.
    if B < 8:
        return jax.nn.sigmoid(x2d.astype(jnp.float32) @ w.T + b)

    # ---- VMEM-aware tile cap (v7x: 64 MiB physical / 32 MiB scoped default) --
    try:
        vmem_cap = pltpu.get_tpu_info().vmem_capacity_bytes
    except Exception:
        vmem_cap = 64 << 20  # conservative fallback (v7x per-TC)
    budget = min(vmem_cap // 2, 28 << 20)
    # Per batch row: double-buffered native-dtype x tile + f32 upcast +
    # (worst case) materialized (TB, D) product.
    per_row = 2 * D * x_bytes + 2 * D * 4
    tb_cap = max(_SUBLANES, (budget // per_row) // _SUBLANES * _SUBLANES)
    tb = min(tb_max, tb_cap)

    # ---- Balanced batch tiling: padding stays within one sublane group -------
    n_tiles = pl.cdiv(B, tb)
    if B >= 2 * _SUBLANES:
        n_tiles = max(n_tiles, 2)          # keep both v7x TensorCores streaming
    TB = _round_up(pl.cdiv(B, n_tiles), _SUBLANES)
    Bp = n_tiles * TB
    if Bp != B:
        x2d = jnp.pad(x2d, ((0, Bp - B), (0, 0)))

    cost = pl.CostEstimate(
        flops=2 * Bp * D,
        transcendentals=Bp,
        bytes_accessed=Bp * D * x_bytes + D * 4 + Bp * 4,
    )

    out_padded = pl.pallas_call(
        _shadow_kernel,
        out_shape=jax.ShapeDtypeStruct((Bp, 1), jnp.float32),
        grid_spec=pl.GridSpec(
            grid=(n_tiles,),
            in_specs=[
                pl.BlockSpec((TB, D), lambda i: (i, 0)),               # x streams
                pl.BlockSpec((1, D), lambda i: (0, 0)),                # w resident
                pl.BlockSpec(memory_space=pltpu.MemorySpace.SMEM),     # bias scalar
            ],
            # (TB, 1) block: lane dim equals full array dim -> legal; output
            # bytes are ~D x smaller than the x stream (see header note).
            out_specs=pl.BlockSpec((TB, 1), lambda i: (i, 0)),
        ),
        compiler_params=pltpu.CompilerParams(
            dimension_semantics=("parallel",),
            # v5e scoped default is 16 MiB; raise it, but stay well inside
            # v7x's 64 MiB physical VMEM.
            vmem_limit_bytes=int(min(vmem_cap * 3 // 4, 96 << 20)),
        ),
        cost_estimate=cost,
    )(x2d, w, b)

    return out_padded[:B]


if __name__ == "__main__":
    key = jax.random.PRNGKey(0)
    k_x, k_w, k_b = jax.random.split(key, 3)

    # MNIST-like feature dim: 1 channel, 28x28 -> D = 784
    C, H, W = 1, 28, 28
    D = C * H * W

    # Deterministic nn.Linear-style init: U(-1/sqrt(D), 1/sqrt(D))
    bound = 1.0 / jnp.sqrt(jnp.float32(D))
    weight = jax.random.uniform(k_w, (1, D), minval=-bound, maxval=bound,
                                dtype=jnp.float32)
    bias = jax.random.uniform(k_b, (1,), minval=-bound, maxval=bound,
                              dtype=jnp.float32)

    def ref_forward(x):
        xf = x.reshape(x.shape[0], -1).astype(jnp.float32)
        return jax.nn.sigmoid(jnp.sum(xf * weight, axis=-1, keepdims=True) + bias)

    # Case 1: f32 activations, batch splits into 2 tiles (megacore path).
    B1 = 64
    x1 = jax.random.normal(k_x, (B1, C, H, W), dtype=jnp.float32)
    out1 = jax.block_until_ready(shadow_model_forward(x1, weight, bias))
    assert out1.shape == (B1, 1)
    assert jnp.allclose(out1, ref_forward(x1), atol=1e-5), "f32 mismatch"

    # Case 2: odd batch exercising the balanced-tiling / padding path.
    B2 = 20
    x2 = jax.random.normal(jax.random.fold_in(k_x, 1), (B2, C, H, W),
                           dtype=jnp.float32)
    out2 = jax.block_until_ready(shadow_model_forward(x2, weight, bias))
    assert out2.shape == (B2, 1)
    assert jnp.allclose(out2, ref_forward(x2), atol=1e-5), "padded-batch mismatch"

    # Case 3: bf16 activations streamed natively (half the HBM bytes).
    x3 = x1.astype(jnp.bfloat16)
    out3 = jax.block_until_ready(shadow_model_forward(x3, weight, bias))
    assert out3.shape == (B1, 1)
    assert jnp.allclose(out3, ref_forward(x3), atol=1e-5), "bf16 mismatch"

    print("KERNEL_OK")
</pallas_src>

<mosaic_0001>
module attributes {stable_mosaic.version = 11 : i64} {
  func.func @_shadow_kernel(%arg0: i32, %arg1: memref<32x784xf32, #tpu.memory_space<vmem>>, %arg2: memref<1x784xf32, #tpu.memory_space<vmem>>, %arg3: memref<1x1xf32, #tpu.memory_space<smem>>, %arg4: memref<32x1xf32, #tpu.memory_space<vmem>>) attributes {dimension_semantics = [#tpu.dimension_semantics<parallel>], iteration_bounds = array<i64: 2>, scalar_prefetch = 0 : i64, scratch_operands = 0 : i64, tpu.core_type = #tpu.core_type<tc>, window_params = [{transform_indices = @transform_0, window_bounds = array<i64: 32, 784>}, {pipeline_mode = #tpu.pipeline_mode<synchronous>, transform_indices = @transform_1, window_bounds = array<i64: 1, 784>}, {transform_indices = @transform_2, window_bounds = array<i64: 1, 1>}, {transform_indices = @transform_3, window_bounds = array<i64: 32, 1>}]} {
    %c0 = arith.constant 0 : index
    %c0_0 = arith.constant 0 : index
    %0 = vector.load %arg1[%c0, %c0_0] : memref<32x784xf32, #tpu.memory_space<vmem>>, vector<32x784xf32>
    %c0_1 = arith.constant 0 : index
    %c0_2 = arith.constant 0 : index
    %1 = vector.load %arg2[%c0_1, %c0_2] : memref<1x784xf32, #tpu.memory_space<vmem>>, vector<1x784xf32>
    %2 = vector.broadcast %1 : vector<1x784xf32> to vector<32x784xf32>
    %3 = arith.mulf %0, %2 : vector<32x784xf32>
    %cst = arith.constant dense<0.000000e+00> : vector<32xf32>
    %4 = vector.multi_reduction <add>, %3, %cst [1] : vector<32x784xf32> to vector<32xf32>
    %5 = vector.shape_cast %4 : vector<32xf32> to vector<32x1xf32>
    %c0_3 = arith.constant 0 : index
    %c0_4 = arith.constant 0 : index
    %6 = memref.load %arg3[%c0_3, %c0_4] : memref<1x1xf32, #tpu.memory_space<smem>>
    %7 = vector.broadcast %6 : f32 to vector<32x1xf32>
    %8 = arith.addf %5, %7 : vector<32x1xf32>
    %9 = arith.negf %8 : vector<32x1xf32>
    %10 = math.exp %9 : vector<32x1xf32>
    %cst_5 = arith.constant 1.000000e+00 : f32
    %11 = vector.broadcast %cst_5 : f32 to vector<32x1xf32>
    %12 = arith.addf %11, %10 : vector<32x1xf32>
    %13 = arith.divf %11, %12 : vector<32x1xf32>
    %c0_6 = arith.constant 0 : index
    %c0_7 = arith.constant 0 : index
    %14 = vector.load %arg4[%c0_6, %c0_7] : memref<32x1xf32, #tpu.memory_space<vmem>>, vector<32x1xf32>
    tpu.vector_store %arg4[%c0_6, %c0_7], %13 {strides = array<i32>} : memref<32x1xf32, #tpu.memory_space<vmem>>, vector<32x1xf32>,
    return
  }
  func.func @transform_0(%arg0: i32) -> (i32, i32) {
    %c0_i32 = arith.constant 0 : i32
    %c0_i32_0 = arith.constant 0 : i32
    return %arg0, %c0_i32 : i32, i32
  }
  func.func @transform_1(%arg0: i32) -> (i32, i32) {
    %c0_i32 = arith.constant 0 : i32
    %c0_i32_0 = arith.constant 0 : i32
    %c0_i32_1 = arith.constant 0 : i32
    return %c0_i32, %c0_i32_0 : i32, i32
  }
  func.func @transform_2(%arg0: i32) -> (i32, i32) {
    %c0_i32 = arith.constant 0 : i32
    %c0_i32_0 = arith.constant 0 : i32
    %c0_i32_1 = arith.constant 0 : i32
    return %c0_i32, %c0_i32_0 : i32, i32
  }
  func.func @transform_3(%arg0: i32) -> (i32, i32) {
    %c0_i32 = arith.constant 0 : i32
    %c0_i32_0 = arith.constant 0 : i32
    return %arg0, %c0_i32 : i32, i32
  }
}

</mosaic_0001>

<llo_original>
// kernel: tpu_custom_call.1
$region0: #{tpu_custom_call.1}
  #allocation0 [shape = 'u32[]', space=smem, size = 0x4, offset = 0x4, fixed_abs, tag = 'smem constant byte address 0x4 - core index']
  #allocation1 [shape = 'u32[72,128]{1,0:T(1,128)}', space=vmem, size = 0x9000, scoped, tag = 'internal scratch']
  #allocation2 [shape = 'f32[1,1]{1,0:T(1,128)S(6)}', space=smem, size = 0x200, scoped, tag = 'scoped memory for tpu_custom_call.1']
  %s0 = inlined_call_operand.hbm [shape: f32[64,784], index: 0, kind: input, shape index: {}]
  %s1 = inlined_call_operand.hbm [shape: f32[1,784], index: 1, kind: input, shape index: {}]
  %s2 = inlined_call_operand.<no memory space> [shape: f32[1,1], index: 2, kind: input, shape index: {}]
  %s3 = inlined_call_operand.vmem [shape: f32[64,1], index: 3, kind: output, shape index: {}]
  %s4 = sld [smem:[#allocation0]]
  $region53: #{tpu_custom_call.1} parent=0
    _
  %s6 = ssub.s32 1, %s4
  %s7 = scalar_select 0, %s6, %s4
  %8 = sst [smem:[#allocation2]] %s2
  $region1: #{tpu_custom_call.1} parent=0
    #allocation3 [shape = 'u8[229376]{0}', space=vmem, size = 0x38000, scoped, tag = 'input window, operand 0']
    #allocation4 [shape = 's32[2]{0}', space=sflag, size = 0x8, scoped, tag = 'scoped memory for tpu_custom_call.1']
    #allocation5 [shape = 'u8[3584]{0}', space=vmem, size = 0x1000, scoped, tag = 'input window, operand 1, single buffered']
    #allocation6 [shape = 's32[1]{0}', space=sflag, size = 0x4, scoped, tag = 'scoped memory for tpu_custom_call.1']
    %9 = vsyncpa [#allocation4], 0
    %s10 = scalar_lea.sflag [#allocation4], 1
    %11 = vsyncpa %s10, 0
    %12 = vsyncpa [#allocation6], 0
    loop: start=0, step=1, limit=4
    $region2: #{tpu_custom_call.1} parent=1 // loop_pre_header
      _
    $region3: #{tpu_custom_call.1} parent=1 // loop_header
      %s14 = sphi 0, %s18
      %p15 = scmp.ge.s32.totalorder %s14, 4
      %s24 = sphi 0, %s26
      %s27 = sphi 0, %s24
      %s28 = sphi 0, %s27
      %s44 = sphi 0, %s28
      %s48 = sphi 0, %s48
      %s50 = sphi 0, %s48
      %s51 = sphi 0, %s50
      %s65 = sphi 0, %s51
      %s69 = sphi 0, %s69
      %s71 = sphi 0, %s69
      %s72 = sphi 0, %s71
      %s86 = sphi 0, %s72
      %s92 = sphi 0, %s94
      %s95 = sphi 0, %s92
      %s96 = sphi 0, %s95
      %s112 = sphi 0, %s96
    $region4: #{tpu_custom_call.1} parent=1 // loop_header_branch
      %17 = sbr.rel (%p15) target = $region8
    $region5: #{tpu_custom_call.1} parent=1 // loop_body
      %s19 = ssub.s32 %s14, 1
      %s20 = ssub.s32 %s14, 2
      %s21 = sadd.s32 %s14, 1
      %s22 = ssub.s32 %s14, %s21
      %p23 = scmp.eq.s32.totalorder %s22, 0
      %s25 = sadd.s32 %s24, 1
      %s26 = scalar_select %p23, %s24, %s25
      %p29 = pneg %p23
      %p30 = scmp.eq.s32.totalorder %s14, 1
      %p31 = por %p29, %p30
      %p32 = scmp.ne.s32.totalorder %s24, %s27
      %p33 = scmp.eq.s32.totalorder %s14, 0
      %p34 = por %p32, %p33
      %p35 = scmp.ne.s32.totalorder %s24, %s27
      %p36 = scmp.eq.s32.totalorder %s19, 1
      %p37 = por %p35, %p36
      %p38 = scmp.ne.s32.totalorder %s27, %s28
      %p39 = scmp.eq.s32.totalorder %s19, 0
      %p40 = por %p38, %p39
      %p41 = scmp.ne.s32.totalorder %s27, %s28
      %p42 = scmp.eq.s32.totalorder %s20, 1
      %p43 = por %p41, %p42
      %p45 = scmp.ne.s32.totalorder %s28, %s44
      %p46 = scmp.eq.s32.totalorder %s20, 0
      %p47 = por %p45, %p46
      %s49 = sadd.s32 %s48, 1
      %p52 = scmp.eq.s32.totalorder %s14, 1
      %p53 = scmp.ne.s32.totalorder %s48, %s50
      %p54 = scmp.eq.s32.totalorder %s14, 0
      %p55 = por %p53, %p54
      %p56 = scmp.ne.s32.totalorder %s48, %s50
      %p57 = scmp.eq.s32.totalorder %s19, 1
      %p58 = por %p56, %p57
      %p59 = scmp.ne.s32.totalorder %s50, %s51
      %p60 = scmp.eq.s32.totalorder %s19, 0
      %p61 = por %p59, %p60
      %p62 = scmp.ne.s32.totalorder %s50, %s51
      %p63 = scmp.eq.s32.totalorder %s20, 1
      %p64 = por %p62, %p63
      %p66 = scmp.ne.s32.totalorder %s51, %s65
      %p67 = scmp.eq.s32.totalorder %s20, 0
      %p68 = por %p66, %p67
      %s70 = sadd.s32 %s69, 1
      %p73 = scmp.eq.s32.totalorder %s14, 1
      %p74 = scmp.ne.s32.totalorder %s69, %s71
      %p75 = scmp.eq.s32.totalorder %s14, 0
      %p76 = por %p74, %p75
      %p77 = scmp.ne.s32.totalorder %s69, %s71
      %p78 = scmp.eq.s32.totalorder %s19, 1
      %p79 = por %p77, %p78
      %p80 = scmp.ne.s32.totalorder %s71, %s72
      %p81 = scmp.eq.s32.totalorder %s19, 0
      %p82 = por %p80, %p81
      %p83 = scmp.ne.s32.totalorder %s71, %s72
      %p84 = scmp.eq.s32.totalorder %s20, 1
      %p85 = por %p83, %p84
      %p87 = scmp.ne.s32.totalorder %s72, %s86
      %p88 = scmp.eq.s32.totalorder %s20, 0
      %p89 = por %p87, %p88
      %s90 = ssub.s32 %s14, %s21
      %p91 = scmp.eq.s32.totalorder %s90, 0
      %s93 = sadd.s32 %s92, 1
      %s94 = scalar_select %p91, %s92, %s93
      %p97 = pneg %p91
      %p98 = scmp.eq.s32.totalorder %s14, 1
      %p99 = por %p97, %p98
      %p100 = scmp.ne.s32.totalorder %s92, %s95
      %p101 = scmp.eq.s32.totalorder %s14, 0
      %p102 = por %p100, %p101
      %p103 = scmp.ne.s32.totalorder %s92, %s95
      %p104 = scmp.eq.s32.totalorder %s19, 1
      %p105 = por %p103, %p104
      %p106 = scmp.ne.s32.totalorder %s95, %s96
      %p107 = scmp.eq.s32.totalorder %s19, 0
      %p108 = por %p106, %p107
      %p109 = scmp.ne.s32.totalorder %s95, %s96
      %p110 = scmp.eq.s32.totalorder %s20, 1
      %p111 = por %p109, %p110
      %p113 = scmp.ne.s32.totalorder %s96, %s112
      %p114 = scmp.eq.s32.totalorder %s20, 0
      %p115 = por %p113, %p114
      %p116 = scmp.le.s32.totalorder 1, %s14
      %p117 = scmp.lt.s32.totalorder %s14, 3
      %p118 = pnand %p116, %p117
      %p119 = pneg %p118
      // Predicated region
      $region9: #{tpu_custom_call.1} parent=5 // pred_check
        _
      $region10: #{tpu_custom_call.1} parent=5 // pred_check_branch
        %121 = sbr.rel (%p118) target = $region12
      $region11: #{tpu_custom_call.1} parent=5 // pred_region
        %s122 = ssub.s32 %s14, 1
        // Predicated region
        $region13: #{tpu_custom_call.1} parent=11 // pred_check
          %p123 = pneg %p61
        $region14: #{tpu_custom_call.1} parent=11 // pred_check_branch
          %125 = sbr.rel (%p123) target = $region16
        $region15: #{tpu_custom_call.1} parent=11 // pred_region
          %127 = vsyncadd [#allocation6], 0
          %s129 = sshll.u32 %s1, 4
          %s130 = int_to_ptr.hbm [resolvable:$true] %s129
          %s131 = sshll.u32 [#allocation5], 4
          %s132 = int_to_ptr.vmem [resolvable:$true] %s131
          %134 = dma.hbm_to_vmem [thread:$0]  %s130, 112, %s132, [#allocation6]
        $region16: #{tpu_custom_call.1} parent=11 // pred_fallthru
          _
        // Predicated region
        $region17: #{tpu_custom_call.1} parent=11 // pred_check
          %p135 = pneg %p82
        $region18: #{tpu_custom_call.1} parent=11 // pred_check_branch
          %137 = sbr.rel (%p135) target = $region20
        $region19: #{tpu_custom_call.1} parent=11 // pred_region
          _
        $region20: #{tpu_custom_call.1} parent=11 // pred_fallthru
          _
      $region12: #{tpu_custom_call.1} parent=5 // pred_fallthru
        _
      %p138 = scmp.lt.s32.totalorder %s14, 2
      // Predicated region
      $region21: #{tpu_custom_call.1} parent=5 // pred_check
        %p139 = pneg %p138
      $region22: #{tpu_custom_call.1} parent=5 // pred_check_branch
        %141 = sbr.rel (%p139) target = $region24
      $region23: #{tpu_custom_call.1} parent=5 // pred_region
        // Predicated region
        $region25: #{tpu_custom_call.1} parent=23 // pred_check
          %p142 = pneg %p34
        $region26: #{tpu_custom_call.1} parent=23 // pred_check_branch
          %144 = sbr.rel (%p142) target = $region28
        $region27: #{tpu_custom_call.1} parent=23 // pred_region
          %s145 = sand.u32 %s24, 1
          %s146 = scalar_lea.sflag [#allocation4], %s145
          %s147 = sand.u32 %s24, 1
          %s148 = smul.addr %s147, 224
          %s149 = scalar_lea.vmem [#allocation3], %s148
          %s150 = smul.u32 4, %s14
          %152 = vsyncadd %s146, 0
          %s153 = smul.addr %s150, 7
          %s154 = smul.addr %s153, 8
          %s155 = scalar_lea.hbm %s0, %s154
          %s156 = sshll.u32 %s155, 4
          %s157 = int_to_ptr.hbm [resolvable:$true] %s156
          %s158 = sshll.u32 %s149, 4
          %s159 = int_to_ptr.vmem [resolvable:$true] %s158
          %164 = dma.hbm_to_vmem [thread:$0]  %s157, 3584, %s159, %s146, 896, 896, 56
        $region28: #{tpu_custom_call.1} parent=23 // pred_fallthru
          _
      $region24: #{tpu_custom_call.1} parent=5 // pred_fallthru
        _
      %p165 = scmp.le.s32.totalorder 1, %s14
      %p166 = scmp.lt.s32.totalorder %s14, 3
      %p167 = pnand %p165, %p166
      %p168 = pneg %p167
      // Predicated region
      $region29: #{tpu_custom_call.1} parent=5 // pred_check
        _
      $region30: #{tpu_custom_call.1} parent=5 // pred_check_branch
        %170 = sbr.rel (%p167) target = $region32
      $region31: #{tpu_custom_call.1} parent=5 // pred_region
        %s171 = ssub.s32 %s14, 1
        %s172 = sand.u32 %s27, 1
        %s173 = scalar_lea.sflag [#allocation4], %s172
        %s174 = sand.u32 %s27, 1
        %s175 = smul.addr %s174, 224
        %s176 = scalar_lea.vmem [#allocation3], %s175
        // Predicated region
        $region33: #{tpu_custom_call.1} parent=31 // pred_check
          %p177 = pneg %p40
        $region34: #{tpu_custom_call.1} parent=31 // pred_check_branch
          %179 = sbr.rel (%p177) target = $region36
        $region35: #{tpu_custom_call.1} parent=31 // pred_region
          %181 = dma.done %s173, 3584
        $region36: #{tpu_custom_call.1} parent=31 // pred_fallthru
          _
        // Predicated region
        $region37: #{tpu_custom_call.1} parent=31 // pred_check
          %p182 = pneg %p61
        $region38: #{tpu_custom_call.1} parent=31 // pred_check_branch
          %184 = sbr.rel (%p182) target = $region40
        $region39: #{tpu_custom_call.1} parent=31 // pred_region
          %186 = dma.done [#allocation6], 112
        $region40: #{tpu_custom_call.1} parent=31 // pred_fallthru
          _
        %s187 = sand.u32 %s27, 1
        %s188 = scalar_lea.sflag [#allocation4], %s187
        %s189 = sand.u32 %s27, 1
        %s190 = smul.addr %s189, 224
        %s191 = scalar_lea.vmem [#allocation3], %s190
        %p192 = pneg %p40
        %p193 = pneg %p37
        %p194 = pneg %p61
        %p195 = pneg %p58
        %p196 = pneg %p82
        %p197 = pneg %p79
        %p198 = pneg %p108
        %p199 = pneg %p105
        %s200 = smul.u32 4, %s19
        %p201 = scmp.lt.s32.totalorder %s200, 7
        %s202 = scalar_select %p201, %s200, 7
        %s203 = smul.addr %s202, 8
        %s204 = scalar_lea.vmem %s3, %s203
        %s205 = smul.u32 4, %s19
        %s206 = smul.u32 4, %s19
        %p207 = scmp.lt.s32.totalorder %s206, 7
        %s208 = scalar_select %p207, %s206, 7
        %s209 = smul.addr %s208, 8
        %s210 = scalar_lea.vmem %s3, %s209
        %s211 = smul.u32 4, %s19
        %v212 = vld [vmem:[%s176] sm:$0xff]
        %v213 = vld [vmem:[%s176 + $0x8] sm:$0xff]
        %v214 = vld [vmem:[%s176 + $0x10] sm:$0xff]
        %v215 = vld [vmem:[%s176 + $0x18] sm:$0xff]
        %v216 = vld [vmem:[%s176 + $0x20] sm:$0xff]
        %v217 = vld [vmem:[%s176 + $0x28] sm:$0xff]
        %v218 = vld [vmem:[%s176 + $0x30] sm:$0xff]
        %v219 = vld [vmem:[%s176 + $0x38] sm:$0xff]
        %v220 = vld [vmem:[%s176 + $0x40] sm:$0xff]
        %v221 = vld [vmem:[%s176 + $0x48] sm:$0xff]
        %v222 = vld [vmem:[%s176 + $0x50] sm:$0xff]
        %v223 = vld [vmem:[%s176 + $0x58] sm:$0xff]
        %v224 = vld [vmem:[%s176 + $0x60] sm:$0xff]
        %v225 = vld [vmem:[%s176 + $0x68] sm:$0xff]
        %v226 = vld [vmem:[%s176 + $0x70] sm:$0xff]
        %v227 = vld [vmem:[%s176 + $0x78] sm:$0xff]
        %v228 = vld [vmem:[%s176 + $0x80] sm:$0xff]
        %v229 = vld [vmem:[%s176 + $0x88] sm:$0xff]
        %v230 = vld [vmem:[%s176 + $0x90] sm:$0xff]
        %v231 = vld [vmem:[%s176 + $0x98] sm:$0xff]
        %v232 = vld [vmem:[%s176 + $0xa0] sm:$0xff]
        %v233 = vld [vmem:[%s176 + $0xa8] sm:$0xff]
        %v234 = vld [vmem:[%s176 + $0xb0] sm:$0xff]
        %v235 = vld [vmem:[%s176 + $0xb8] sm:$0xff]
        %v236 = vld [vmem:[%s176 + $0xc0] sm:$0xff]
        %v237 = vld [vmem:[%s176 + $0xc8] sm:$0xff]
        %v238 = vld [vmem:[%s176 + $0xd0] sm:$0xff]
        %v239 = vld [vmem:[%s176 + $0xd8] sm:$0xff]
        %v240 = vld [vmem:[#allocation5] sm:$0x7f]
        %v242 = vperm.slane %v240, 0
        %v243 = vperm.slane %v240, 1
        %v244 = vperm.slane %v240, 2
        %v245 = vperm.slane %v240, 3
        %v246 = vperm.slane %v240, 4
        %v247 = vperm.slane %v240, 5
        %v248 = vperm.slane %v240, 6
        %v256 = vmul.f32 %v212, %v242
        %v257 = vmul.f32 %v213, %v243
        %v258 = vmul.f32 %v214, %v244
        %v259 = vmul.f32 %v215, %v245
        %v260 = vmul.f32 %v216, %v246
        %v261 = vmul.f32 %v217, %v247
        %v262 = vmul.f32 %v218, %v248
        %v263 = vmul.f32 %v219, %v242
        %v264 = vmul.f32 %v220, %v243
        %v265 = vmul.f32 %v221, %v244
        %v266 = vmul.f32 %v222, %v245
        %v267 = vmul.f32 %v223, %v246
        %v268 = vmul.f32 %v224, %v247
        %v269 = vmul.f32 %v225, %v248
        %v270 = vmul.f32 %v226, %v242
        %v271 = vmul.f32 %v227, %v243
        %v272 = vmul.f32 %v228, %v244
        %v273 = vmul.f32 %v229, %v245
        %v274 = vmul.f32 %v230, %v246
        %v275 = vmul.f32 %v231, %v247
        %v276 = vmul.f32 %v232, %v248
        %v277 = vmul.f32 %v233, %v242
        %v278 = vmul.f32 %v234, %v243
        %v279 = vmul.f32 %v235, %v244
        %v280 = vmul.f32 %v236, %v245
        %v281 = vmul.f32 %v237, %v246
        %v282 = vmul.f32 %v238, %v247
        %v283 = vmul.f32 %v239, %v248
        %v284 = vadd.f32 %v256, %v257
        %v285 = vadd.f32 %v284, %v258
        %v286 = vadd.f32 %v285, %v259
        %v287 = vadd.f32 %v286, %v260
        %v288 = vadd.f32 %v287, %v261
        %vm289 = vcmask 130048
        %v290 = vsel %vm289, %v262, 0.0
        %v291 = vadd.f32 %v288, %v290
        %292 = vadd.xlane.f32.xlu0 %v291
        %v293 = vpop.xlane.xlu0 %292
        %v294 = vadd.f32 %v263, %v264
        %v295 = vadd.f32 %v294, %v265
        %v296 = vadd.f32 %v295, %v266
        %v297 = vadd.f32 %v296, %v267
        %v298 = vadd.f32 %v297, %v268
        %v299 = vsel %vm289, %v269, 0.0
        %v300 = vadd.f32 %v298, %v299
        %301 = vadd.xlane.f32.xlu0 %v300
        %v302 = vpop.xlane.xlu0 %301
        %v303 = vadd.f32 %v270, %v271
        %v304 = vadd.f32 %v303, %v272
        %v305 = vadd.f32 %v304, %v273
        %v306 = vadd.f32 %v305, %v274
        %v307 = vadd.f32 %v306, %v275
        %v308 = vsel %vm289, %v276, 0.0
        %v309 = vadd.f32 %v307, %v308
        %310 = vadd.xlane.f32.xlu0 %v309
        %v311 = vpop.xlane.xlu0 %310
        %v312 = vadd.f32 %v277, %v278
        %v313 = vadd.f32 %v312, %v279
        %v314 = vadd.f32 %v313, %v280
        %v315 = vadd.f32 %v314, %v281
        %v316 = vadd.f32 %v315, %v282
        %v317 = vsel %vm289, %v283, 0.0
        %v318 = vadd.f32 %v316, %v317
        %319 = vadd.xlane.f32.xlu0 %v318
        %v320 = vpop.xlane.xlu0 %319
        %s321 = sld [smem:[#allocation2]]
        %v322 = vstv %s321
        %v323 = vadd.f32 %v293, %v322
        %v324 = vadd.f32 %v302, %v322
        %v325 = vadd.f32 %v311, %v322
        %v326 = vadd.f32 %v320, %v322
        %v327 = vxor.u32 %v323, 2147483648
        %v328 = vxor.u32 %v324, 2147483648
        %v329 = vxor.u32 %v325, 2147483648
        %v330 = vxor.u32 %v326, 2147483648
        %v331 = vmul.f32 %v327, 1.442695
        %v332 = vpow.pop %v331
        %v333 = vmul.f32 %v328, 1.442695
        %v334 = vpow.pop %v333
        %v335 = vmul.f32 %v329, 1.442695
        %v336 = vpow.pop %v335
        %v337 = vmul.f32 %v330, 1.442695
        %v338 = vpow.pop %v337
        %v339 = vadd.f32 %v332, 1.0
        %v340 = vadd.f32 %v334, 1.0
        %v341 = vadd.f32 %v336, 1.0
        %v342 = vadd.f32 %v338, 1.0
        %v343 = vrcp.pop %v339
        %v344 = vmul.f32 %v339, %v343
        %v345 = vsub.f32 1.0, %v344
        %v346 = vmul.f32 %v343, %v345
        %v347 = vadd.f32 %v343, %v346
        %vm348 = vweird.f32 %v339
        %vm349 = vweird.f32 %v343
        %vm350 = vmor %vm348, %vm349
        %v351 = vsel %vm350, %v343, %v347
        %v352 = vand.u32 2147483647, %v339
        %vm353 = vcmp.eq.f32.partialorder %v352, 8.507059e+37
        %v354 = vand.u32 %v339, 2147483648
        %v355 = vor.u32 1.1754944e-38, %v354
        %v356 = vsel %vm353, %v355, %v351
        %v357 = vmul.f32 1.0, %v356
        %v358 = vrcp.pop %v340
        %v359 = vmul.f32 %v340, %v358
        %v360 = vsub.f32 1.0, %v359
        %v361 = vmul.f32 %v358, %v360
        %v362 = vadd.f32 %v358, %v361
        %vm363 = vweird.f32 %v340
        %vm364 = vweird.f32 %v358
        %vm365 = vmor %vm363, %vm364
        %v366 = vsel %vm365, %v358, %v362
        %v367 = vand.u32 2147483647, %v340
        %vm368 = vcmp.eq.f32.partialorder %v367, 8.507059e+37
        %v369 = vand.u32 %v340, 2147483648
        %v370 = vor.u32 1.1754944e-38, %v369
        %v371 = vsel %vm368, %v370, %v366
        %v372 = vmul.f32 1.0, %v371
        %v373 = vrcp.pop %v341
        %v374 = vmul.f32 %v341, %v373
        %v375 = vsub.f32 1.0, %v374
        %v376 = vmul.f32 %v373, %v375
        %v377 = vadd.f32 %v373, %v376
        %vm378 = vweird.f32 %v341
        %vm379 = vweird.f32 %v373
        %vm380 = vmor %vm378, %vm379
        %v381 = vsel %vm380, %v373, %v377
        %v382 = vand.u32 2147483647, %v341
        %vm383 = vcmp.eq.f32.partialorder %v382, 8.507059e+37
        %v384 = vand.u32 %v341, 2147483648
        %v385 = vor.u32 1.1754944e-38, %v384
        %v386 = vsel %vm383, %v385, %v381
        %v387 = vmul.f32 1.0, %v386
        %v388 = vrcp.pop %v342
        %v389 = vmul.f32 %v342, %v388
        %v390 = vsub.f32 1.0, %v389
        %v391 = vmul.f32 %v388, %v390
        %v392 = vadd.f32 %v388, %v391
        %vm393 = vweird.f32 %v342
        %vm394 = vweird.f32 %v388
        %vm395 = vmor %vm393, %vm394
        %v396 = vsel %vm395, %v388, %v392
        %v397 = vand.u32 2147483647, %v342
        %vm398 = vcmp.eq.f32.partialorder %v397, 8.507059e+37
        %v399 = vand.u32 %v342, 2147483648
        %v400 = vor.u32 1.1754944e-38, %v399
        %v401 = vsel %vm398, %v400, %v396
        %v402 = vmul.f32 1.0, %v401
        %vm403 = vcmask 7168
        %404 = vst.msk [vmem:[%s210] sm:$0xff] %vm403, %v357
        %405 = vst.msk [vmem:[%s210 + $0x8] sm:$0xff] %vm403, %v372
        %406 = vst.msk [vmem:[%s210 + $0x10] sm:$0xff] %vm403, %v387
        %407 = vst.msk [vmem:[%s210 + $0x18] sm:$0xff] %vm403, %v402
        %s408 = smul.u32 4, %s19
        %p409 = scmp.lt.s32.totalorder %s408, 7
        %s410 = scalar_select %p409, %s408, 7
        %s411 = smul.addr %s410, 8
        %s412 = scalar_lea.vmem %s3, %s411
        // Predicated region
        $region41: #{tpu_custom_call.1} parent=31 // pred_check
          %p413 = pneg %p105
        $region42: #{tpu_custom_call.1} parent=31 // pred_check_branch
          %415 = sbr.rel (%p413) target = $region44
        $region43: #{tpu_custom_call.1} parent=31 // pred_region
          %s416 = smul.u32 4, %s19
        $region44: #{tpu_custom_call.1} parent=31 // pred_fallthru
          _
      $region32: #{tpu_custom_call.1} parent=5 // pred_fallthru
        _
      %p417 = scmp.le.s32.totalorder 2, %s14
      // Predicated region
      $region45: #{tpu_custom_call.1} parent=5 // pred_check
        %p418 = pneg %p417
      $region46: #{tpu_custom_call.1} parent=5 // pred_check_branch
        %420 = sbr.rel (%p418) target = $region48
      $region47: #{tpu_custom_call.1} parent=5 // pred_region
        %s421 = ssub.s32 %s14, 2
        // Predicated region
        $region49: #{tpu_custom_call.1} parent=47 // pred_check
          %p422 = pneg %p111
        $region50: #{tpu_custom_call.1} parent=47 // pred_check_branch
          %424 = sbr.rel (%p422) target = $region52
        $region51: #{tpu_custom_call.1} parent=47 // pred_region
          %s425 = smul.u32 4, %s20
          %p426 = scmp.lt.s32.totalorder %s425, 7
          %s427 = scalar_select %p426, %s425, 7
          %s428 = smul.addr %s427, 8
          %s429 = scalar_lea.vmem %s3, %s428
        $region52: #{tpu_custom_call.1} parent=47 // pred_fallthru
          _
      $region48: #{tpu_custom_call.1} parent=5 // pred_fallthru
        _
    $region6: #{tpu_custom_call.1} parent=1 // loop_footer
      %s18 = sadd.s32 1, %s14
    $region7: #{tpu_custom_call.1} parent=1 // loop_footer_branch
      %13 = sbr.rel target = $region3
    $region8: #{tpu_custom_call.1} parent=1 // loop_exit
      _
    %430 = vsyncpa [#allocation4], 1
    %s431 = scalar_lea.sflag [#allocation4], 1
    %432 = vsyncpa %s431, 1
    %433 = vsyncpa [#allocation6], 1

</llo_original>
